<compile_context>
chip_gen: v5e
topology: v5e:2x2
jax: 0.10.0
libtpu: 0.0.40
codegen_flags: <defaults>
</compile_context>

<pallas_src>
import functools
import math

import jax
import jax.numpy as jnp
from jax.experimental import pallas as pl
from jax.experimental.pallas import tpu as pltpu

_LANES = 128
_SUBLANES = 8


def _sublane_multiple(dtype) -> int:
    # Native sublane tile: f32/i32 -> 8, bf16/f16 -> 16, int8/fp8 -> 32.
    itemsize = jnp.dtype(dtype).itemsize
    return _SUBLANES * max(1, 4 // int(itemsize))


def _device_profile():
    """Return (ncores, vmem_block_budget_bytes, vmem_limit_bytes) per chip."""
    kind = ""
    try:
        kind = jax.devices()[0].device_kind.lower()
    except Exception:  # pragma: no cover - defensive
        pass
    if "v7" in kind:
        # 2 TensorCores/chip, ~3.2 TB/s HBM, 64 MiB physical VMEM per core.
        return 2, 34 << 20, 48 << 20
    if "v6" in kind:
        # Single TC, 128 MiB physical VMEM: big blocks + explicit limit.
        return 1, 48 << 20, 64 << 20
    # v5e / unknown: conservative (but still with an explicit, safe limit).
    return 1, 20 << 20, 32 << 20


def _partial_sums(pr, gt, valid, threshold):
    """(8,128) partial sums of tp, sum(pr), sum(gt) for one block."""
    gt_f = gt.astype(jnp.float32)
    if threshold is not None:
        m = pr > threshold                   # compare in native dtype (VPU)
        pr_f = m.astype(jnp.float32)         # binarized prediction count
        tp_f = jnp.where(m, gt_f, 0.0)       # gt * binarized(pr) without a mul
    else:
        pr_f = pr.astype(jnp.float32)
        tp_f = gt_f * pr_f
    if valid is not None:
        tp_f = jnp.where(valid, tp_f, 0.0)
        pr_f = jnp.where(valid, pr_f, 0.0)
        gt_f = jnp.where(valid, gt_f, 0.0)

    def vsum(x):
        # (block_rows,128) -> (block_rows//8, 8, 128): groups of 8 rows are
        # native f32 vreg tiles, so the leading-axis sum is pure VPU vadds
        # into a single-vreg partial -- no per-step cross-sublane XLU fold.
        return x.reshape(-1, _SUBLANES, _LANES).sum(axis=0)

    return vsum(tp_f), vsum(pr_f), vsum(gt_f)


def _fscore_kernel(pr_ref, gt_ref, out_ref, tp_acc, pr_acc, gt_acc, *,
                   threshold, activation, full_rows, rem_lanes, block_rows,
                   blocks_per_core, ncores):
    if ncores > 1:
        c = pl.program_id(0)      # core-split axis ("parallel", v7x megacore)
        j = pl.program_id(1)      # streaming / reduction axis ("arbitrary")
        stream_axis = 1
    else:
        c = 0
        j = pl.program_id(0)
        stream_axis = 0

    @pl.when(j == 0)
    def _init():
        tp_acc[...] = jnp.zeros_like(tp_acc)
        pr_acc[...] = jnp.zeros_like(pr_acc)
        gt_acc[...] = jnp.zeros_like(gt_acc)

    pr = pr_ref[...]
    gt = gt_ref[...]
    if activation == "sigmoid":
        # Only reached when the sigmoid could not be folded into a logit
        # threshold (sigmoid + threshold=None / out-of-(0,1) threshold).
        pr = jax.nn.sigmoid(pr.astype(jnp.float32))

    blk = c * blocks_per_core + j            # logical (unclamped) block id
    row_start = blk * block_rows             # first global row of this block

    def _accumulate(valid):
        tp_p, pr_p, gt_p = _partial_sums(pr, gt, valid, threshold)
        tp_acc[...] += tp_p
        pr_acc[...] += pr_p
        gt_acc[...] += gt_p

    # Fast path: every row of this block is a fully-valid row -> no mask work.
    @pl.when(row_start + block_rows <= full_rows)
    def _full_block():
        _accumulate(None)

    # Cold path: ragged tail, wrapper row padding, or clamped duplicate block.
    # Row-granular mask + a lane mask only for the single partial row; avoids
    # full-block int32 flat-index temporaries (and any int32 overflow).
    @pl.when(row_start + block_rows > full_rows)
    def _tail_block():
        g_row = row_start + jax.lax.broadcasted_iota(
            jnp.int32, (block_rows, 1), 0)
        valid = g_row < full_rows
        if rem_lanes:
            lane = jax.lax.broadcasted_iota(jnp.int32, (1, _LANES), 1)
            valid = valid | ((g_row == full_rows) & (lane < rem_lanes))
        _accumulate(valid)

    @pl.when(j == pl.num_programs(stream_axis) - 1)
    def _finalize():
        # Direct, fully-aligned (8,128) stores; no concatenate / relayout.
        out_ref[0, 0, :, :] = tp_acc[...]
        out_ref[0, 1, :, :] = pr_acc[...]
        out_ref[0, 2, :, :] = gt_acc[...]


def fscore(y_pr, y_gt, *, beta=1, eps=1e-7, threshold=0.5, activation=None,
           ignore_channels=None, block_rows=None):
    """Pallas implementation of Fscore.forward(y_pr, y_gt) -> scalar f32."""
    assert y_pr.shape == y_gt.shape, (y_pr.shape, y_gt.shape)

    if ignore_channels is not None:
        keep = jnp.asarray(
            [ch for ch in range(y_pr.shape[1]) if ch not in ignore_channels],
            dtype=jnp.int32)
        y_pr = jnp.take(y_pr, keep, axis=1)
        y_gt = jnp.take(y_gt, keep, axis=1)

    if activation in (None, "identity"):
        activation = None
    elif activation == "softmax2d":
        # TODO(synk): channel softmax stays in the wrapper (needs the channel
        # axis); kept in the input dtype to avoid an extra f32 HBM copy.
        y_pr = jax.nn.softmax(y_pr, axis=1)
        activation = None
    elif callable(activation):
        y_pr = activation(y_pr)
        activation = None
    elif activation != "sigmoid":
        raise ValueError(f"unsupported activation: {activation!r}")

    if activation == "sigmoid" and threshold is not None:
        t = float(threshold)
        if 0.0 < t < 1.0:
            # Fold sigmoid into the binarization: sigmoid(x) > t <=> x > logit(t).
            threshold = math.log(t / (1.0 - t))
            activation = None
        # else: keep the (rare) in-kernel sigmoid path.

    ncores, block_budget, vmem_limit = _device_profile()

    # Stream native dtypes; any casting happens per block inside the kernel.
    flat_pr = y_pr.reshape(-1)
    flat_gt = y_gt.reshape(-1)
    n = flat_pr.shape[0]
    full_rows, rem_lanes = divmod(n, _LANES)

    # Lay out as (rows, 128) with rows a multiple of 8 so per-block partials
    # reduce into one (8,128) vreg with pure VPU adds.  The (cheap, rare) zero
    # pad is excluded by the in-kernel row/lane mask.
    pad = (-n) % (_SUBLANES * _LANES)
    if pad:
        flat_pr = jnp.pad(flat_pr, (0, pad))
        flat_gt = jnp.pad(flat_gt, (0, pad))
    rows = (n + pad) // _LANES
    pr2d = flat_pr.reshape(rows, _LANES)
    gt2d = flat_gt.reshape(rows, _LANES)

    sub = max(_sublane_multiple(pr2d.dtype), _sublane_multiple(gt2d.dtype))
    if block_rows is None:
        # Per-row VMEM cost: double-buffered streams of both inputs plus ~4
        # block-sized f32 temporaries from the elementwise / mask ops.
        item_pr = int(jnp.dtype(pr2d.dtype).itemsize)
        item_gt = int(jnp.dtype(gt2d.dtype).itemsize)
        bytes_per_row = 2 * _LANES * (item_pr + item_gt) + 4 * _LANES * 4
        max_rows = max(sub, block_budget // bytes_per_row)
        max_rows -= max_rows % sub
        block_rows = rows if rows <= max_rows else max_rows
    if block_rows != rows and block_rows % sub:
        raise ValueError(f"block_rows={block_rows} must be a multiple of {sub}")
    if block_rows % _SUBLANES:
        raise ValueError(
            f"block_rows={block_rows} must be a multiple of {_SUBLANES}")

    n_blocks = pl.cdiv(rows, block_rows)

    if ncores > 1:
        blocks_per_core = pl.cdiv(n_blocks, ncores)
        grid = (ncores, blocks_per_core)

        def in_index_map(c, j):
            # Clamp duplicated / overflow blocks back in range; their
            # contribution is masked to zero inside the kernel.
            return (jnp.minimum(c * blocks_per_core + j, n_blocks - 1), 0)

        out_index_map = lambda c, j: (c, 0, 0, 0)
        # TODO(synk): if plain "parallel" does not shard axis 0 across v7x
        # TensorCores, switch it to pltpu.CORE_PARALLEL.
        dims = ("parallel", "arbitrary")
    else:
        blocks_per_core = n_blocks
        grid = (n_blocks,)
        in_index_map = lambda j: (j, 0)
        out_index_map = lambda j: (0, 0, 0, 0)
        dims = ("arbitrary",)

    kernel = functools.partial(
        _fscore_kernel,
        threshold=threshold,
        activation=activation,
        full_rows=full_rows,
        rem_lanes=rem_lanes,
        block_rows=block_rows,
        blocks_per_core=blocks_per_core,
        ncores=ncores,
    )

    cp_kwargs = dict(dimension_semantics=dims)
    if vmem_limit is not None:
        cp_kwargs["vmem_limit_bytes"] = int(vmem_limit)

    partials = pl.pallas_call(
        kernel,
        out_shape=jax.ShapeDtypeStruct((ncores, 3, _SUBLANES, _LANES),
                                       jnp.float32),
        grid_spec=pltpu.PrefetchScalarGridSpec(
            num_scalar_prefetch=0,
            grid=grid,
            in_specs=[
                pl.BlockSpec((block_rows, _LANES), in_index_map),
                pl.BlockSpec((block_rows, _LANES), in_index_map),
            ],
            out_specs=pl.BlockSpec((1, 3, _SUBLANES, _LANES), out_index_map),
            scratch_shapes=[
                pltpu.VMEM((_SUBLANES, _LANES), jnp.float32),   # tp acc
                pltpu.VMEM((_SUBLANES, _LANES), jnp.float32),   # sum(pr) acc
                pltpu.VMEM((_SUBLANES, _LANES), jnp.float32),   # sum(gt) acc
            ],
        ),
        compiler_params=pltpu.CompilerParams(**cp_kwargs),
    )(pr2d, gt2d)

    # Tiny final reduction + F-score formula (matches the PyTorch reference).
    sums = jnp.sum(partials, axis=(0, 2, 3))       # (3,): tp, sum(pr), sum(gt)
    tp, sum_pr, sum_gt = sums[0], sums[1], sums[2]
    fp = sum_pr - tp
    fn = sum_gt - tp
    b2 = float(beta) ** 2
    return ((1.0 + b2) * tp + eps) / ((1.0 + b2) * tp + b2 * fn + fp + eps)


def _fscore_ref(y_pr, y_gt, *, beta=1, eps=1e-7, threshold=0.5):
    pr = y_pr
    if threshold is not None:
        pr = (pr > threshold).astype(y_pr.dtype)
    tp = jnp.sum(y_gt * pr)
    fp = jnp.sum(pr) - tp
    fn = jnp.sum(y_gt) - tp
    b2 = float(beta) ** 2
    return ((1.0 + b2) * tp + eps) / ((1.0 + b2) * tp + b2 * fn + fp + eps)


if __name__ == "__main__":
    key = jax.random.PRNGKey(0)
    ks = jax.random.split(key, 10)

    # 1) Primary check: NCHW inputs, default threshold=0.5.
    shape = (2, 4, 16, 16)
    y_pr = jax.random.uniform(ks[0], shape, dtype=jnp.float32)
    y_gt = (jax.random.uniform(ks[1], shape) > 0.5).astype(jnp.float32)
    score = jax.block_until_ready(fscore(y_pr, y_gt))
    ref = _fscore_ref(y_pr, y_gt)
    assert jnp.allclose(score, ref, rtol=1e-5, atol=1e-6), (score, ref)

    # 2) Multi-block accumulation path (force small block_rows -> many steps).
    shape2 = (2, 4, 32, 32)
    p2 = jax.random.uniform(ks[2], shape2, dtype=jnp.float32)
    g2 = (jax.random.uniform(ks[3], shape2) > 0.5).astype(jnp.float32)
    s2 = jax.block_until_ready(fscore(p2, g2, block_rows=8))
    r2 = _fscore_ref(p2, g2)
    assert jnp.allclose(s2, r2, rtol=1e-5, atol=1e-6), (s2, r2)

    # 3) Ragged element count (not a multiple of 128) + threshold=None path.
    shape3 = (2, 3, 17, 19)
    p3 = jax.random.uniform(ks[4], shape3, dtype=jnp.float32)
    g3 = (jax.random.uniform(ks[5], shape3) > 0.5).astype(jnp.float32)
    s3 = jax.block_until_ready(fscore(p3, g3, threshold=None))
    r3 = _fscore_ref(p3, g3, threshold=None)
    assert jnp.allclose(s3, r3, rtol=1e-5, atol=1e-6), (s3, r3)

    # 4) Mixed native dtypes streamed as-is (bf16 predictions, f32 targets).
    p4 = jax.random.uniform(ks[6], shape, dtype=jnp.bfloat16)
    g4 = (jax.random.uniform(ks[7], shape) > 0.5).astype(jnp.float32)
    s4 = jax.block_until_ready(fscore(p4, g4))
    r4 = _fscore_ref(p4.astype(jnp.float32), g4)
    assert jnp.allclose(s4, r4, rtol=1e-5, atol=1e-6), (s4, r4)

    # 5) Sigmoid activation folded into a logit-threshold compare.
    logits = jax.random.normal(ks[8], shape, dtype=jnp.float32)
    g5 = (jax.random.uniform(ks[9], shape) > 0.5).astype(jnp.float32)
    s5 = jax.block_until_ready(fscore(logits, g5, activation="sigmoid"))
    r5 = _fscore_ref(jax.nn.sigmoid(logits), g5)
    assert jnp.allclose(s5, r5, rtol=1e-5, atol=1e-6), (s5, r5)

    print("KERNEL_OK")
</pallas_src>

<mosaic_0001>
module attributes {stable_mosaic.version = 11 : i64} {
  func.func @_fscore_kernel(%arg0: i32, %arg1: memref<16x128xf32, #tpu.memory_space<vmem>>, %arg2: memref<16x128xf32, #tpu.memory_space<vmem>>, %arg3: memref<1x3x8x128xf32, #tpu.memory_space<vmem>>, %arg4: memref<8x128xf32, #tpu.memory_space<vmem>>, %arg5: memref<8x128xf32, #tpu.memory_space<vmem>>, %arg6: memref<8x128xf32, #tpu.memory_space<vmem>>) attributes {dimension_semantics = [#tpu.dimension_semantics<arbitrary>], iteration_bounds = array<i64: 1>, scalar_prefetch = 0 : i64, scratch_operands = 3 : i64, tpu.core_type = #tpu.core_type<tc>, window_params = [{transform_indices = @transform_0, window_bounds = array<i64: 16, 128>}, {transform_indices = @transform_1, window_bounds = array<i64: 16, 128>}, {pipeline_mode = #tpu.pipeline_mode<synchronous>, transform_indices = @transform_2, window_bounds = array<i64: 1, 3, 8, 128>}]} {
    %c0_i32 = arith.constant 0 : i32
    %0 = arith.cmpi eq, %arg0, %c0_i32 : i32
    %1 = arith.extui %0 : i1 to i32
    %c0_i32_0 = arith.constant 0 : i32
    %2 = arith.cmpi ne, %1, %c0_i32_0 : i32
    scf.if %2 {
      %cst = arith.constant 0.000000e+00 : f32
      %18 = vector.broadcast %cst : f32 to vector<8x128xf32>
      %c0_13 = arith.constant 0 : index
      %c0_14 = arith.constant 0 : index
      %19 = vector.load %arg4[%c0_13, %c0_14] : memref<8x128xf32, #tpu.memory_space<vmem>>, vector<8x128xf32>
      tpu.vector_store %arg4[%c0_13, %c0_14], %18 {strides = array<i32>} : memref<8x128xf32, #tpu.memory_space<vmem>>, vector<8x128xf32>,
      %cst_15 = arith.constant 0.000000e+00 : f32
      %20 = vector.broadcast %cst_15 : f32 to vector<8x128xf32>
      %c0_16 = arith.constant 0 : index
      %c0_17 = arith.constant 0 : index
      %21 = vector.load %arg5[%c0_16, %c0_17] : memref<8x128xf32, #tpu.memory_space<vmem>>, vector<8x128xf32>
      tpu.vector_store %arg5[%c0_16, %c0_17], %20 {strides = array<i32>} : memref<8x128xf32, #tpu.memory_space<vmem>>, vector<8x128xf32>,
      %cst_18 = arith.constant 0.000000e+00 : f32
      %22 = vector.broadcast %cst_18 : f32 to vector<8x128xf32>
      %c0_19 = arith.constant 0 : index
      %c0_20 = arith.constant 0 : index
      %23 = vector.load %arg6[%c0_19, %c0_20] : memref<8x128xf32, #tpu.memory_space<vmem>>, vector<8x128xf32>
      tpu.vector_store %arg6[%c0_19, %c0_20], %22 {strides = array<i32>} : memref<8x128xf32, #tpu.memory_space<vmem>>, vector<8x128xf32>,
    } else {
    }
    %c0 = arith.constant 0 : index
    %c0_1 = arith.constant 0 : index
    %3 = vector.load %arg1[%c0, %c0_1] : memref<16x128xf32, #tpu.memory_space<vmem>>, vector<16x128xf32>
    %c0_2 = arith.constant 0 : index
    %c0_3 = arith.constant 0 : index
    %4 = vector.load %arg2[%c0_2, %c0_3] : memref<16x128xf32, #tpu.memory_space<vmem>>, vector<16x128xf32>
    %c0_i32_4 = arith.constant 0 : i32
    %5 = arith.addi %c0_i32_4, %arg0 : i32
    %c16_i32 = arith.constant 16 : i32
    %6 = arith.muli %5, %c16_i32 : i32
    %c16_i32_5 = arith.constant 16 : i32
    %7 = arith.addi %6, %c16_i32_5 : i32
    %c16_i32_6 = arith.constant 16 : i32
    %8 = arith.cmpi sle, %7, %c16_i32_6 : i32
    %9 = arith.extui %8 : i1 to i32
    %c0_i32_7 = arith.constant 0 : i32
    %10 = arith.cmpi ne, %9, %c0_i32_7 : i32
    scf.if %10 {
      %cst = arith.constant 5.000000e-01 : f32
      %18 = vector.broadcast %cst : f32 to vector<16x128xf32>
      %19 = arith.cmpf ogt, %3, %18 : vector<16x128xf32>
      %20 = arith.extui %19 : vector<16x128xi1> to vector<16x128xi32>
      %21 = arith.sitofp %20 : vector<16x128xi32> to vector<16x128xf32>
      %cst_13 = arith.constant 0.000000e+00 : f32
      %22 = vector.broadcast %cst_13 : f32 to vector<16x128xf32>
      %23 = arith.select %19, %4, %22 : vector<16x128xi1>, vector<16x128xf32>
      %24 = vector.shape_cast %23 : vector<16x128xf32> to vector<2x8x128xf32>
      %cst_14 = arith.constant dense<0.000000e+00> : vector<8x128xf32>
      %25 = vector.multi_reduction <add>, %24, %cst_14 [0] : vector<2x8x128xf32> to vector<8x128xf32>
      %26 = vector.shape_cast %21 : vector<16x128xf32> to vector<2x8x128xf32>
      %cst_15 = arith.constant dense<0.000000e+00> : vector<8x128xf32>
      %27 = vector.multi_reduction <add>, %26, %cst_15 [0] : vector<2x8x128xf32> to vector<8x128xf32>
      %28 = vector.shape_cast %4 : vector<16x128xf32> to vector<2x8x128xf32>
      %cst_16 = arith.constant dense<0.000000e+00> : vector<8x128xf32>
      %29 = vector.multi_reduction <add>, %28, %cst_16 [0] : vector<2x8x128xf32> to vector<8x128xf32>
      %c0_17 = arith.constant 0 : index
      %c0_18 = arith.constant 0 : index
      %30 = vector.load %arg4[%c0_17, %c0_18] : memref<8x128xf32, #tpu.memory_space<vmem>>, vector<8x128xf32>
      %31 = arith.addf %30, %25 : vector<8x128xf32>
      %c0_19 = arith.constant 0 : index
      %c0_20 = arith.constant 0 : index
      %32 = vector.load %arg4[%c0_19, %c0_20] : memref<8x128xf32, #tpu.memory_space<vmem>>, vector<8x128xf32>
      tpu.vector_store %arg4[%c0_19, %c0_20], %31 {strides = array<i32>} : memref<8x128xf32, #tpu.memory_space<vmem>>, vector<8x128xf32>,
      %c0_21 = arith.constant 0 : index
      %c0_22 = arith.constant 0 : index
      %33 = vector.load %arg5[%c0_21, %c0_22] : memref<8x128xf32, #tpu.memory_space<vmem>>, vector<8x128xf32>
      %34 = arith.addf %33, %27 : vector<8x128xf32>
      %c0_23 = arith.constant 0 : index
      %c0_24 = arith.constant 0 : index
      %35 = vector.load %arg5[%c0_23, %c0_24] : memref<8x128xf32, #tpu.memory_space<vmem>>, vector<8x128xf32>
      tpu.vector_store %arg5[%c0_23, %c0_24], %34 {strides = array<i32>} : memref<8x128xf32, #tpu.memory_space<vmem>>, vector<8x128xf32>,
      %c0_25 = arith.constant 0 : index
      %c0_26 = arith.constant 0 : index
      %36 = vector.load %arg6[%c0_25, %c0_26] : memref<8x128xf32, #tpu.memory_space<vmem>>, vector<8x128xf32>
      %37 = arith.addf %36, %29 : vector<8x128xf32>
      %c0_27 = arith.constant 0 : index
      %c0_28 = arith.constant 0 : index
      %38 = vector.load %arg6[%c0_27, %c0_28] : memref<8x128xf32, #tpu.memory_space<vmem>>, vector<8x128xf32>
      tpu.vector_store %arg6[%c0_27, %c0_28], %37 {strides = array<i32>} : memref<8x128xf32, #tpu.memory_space<vmem>>, vector<8x128xf32>,
    } else {
    }
    %c16_i32_8 = arith.constant 16 : i32
    %11 = arith.addi %6, %c16_i32_8 : i32
    %c16_i32_9 = arith.constant 16 : i32
    %12 = arith.cmpi sgt, %11, %c16_i32_9 : i32
    %13 = arith.extui %12 : i1 to i32
    %c0_i32_10 = arith.constant 0 : i32
    %14 = arith.cmpi ne, %13, %c0_i32_10 : i32
    scf.if %14 {
      %18 = tpu.iota {dimensions = array<i32: 0>} : vector<16x1xi32>
      %19 = vector.broadcast %6 : i32 to vector<16x1xi32>
      %20 = arith.addi %19, %18 : vector<16x1xi32>
      %c16_i32_13 = arith.constant 16 : i32
      %21 = vector.broadcast %c16_i32_13 : i32 to vector<16x1xi32>
      %22 = arith.cmpi slt, %20, %21 : vector<16x1xi32>
      %cst = arith.constant 5.000000e-01 : f32
      %23 = vector.broadcast %cst : f32 to vector<16x128xf32>
      %24 = arith.cmpf ogt, %3, %23 : vector<16x128xf32>
      %25 = arith.extui %24 : vector<16x128xi1> to vector<16x128xi32>
      %26 = arith.sitofp %25 : vector<16x128xi32> to vector<16x128xf32>
      %cst_14 = arith.constant 0.000000e+00 : f32
      %27 = vector.broadcast %cst_14 : f32 to vector<16x128xf32>
      %28 = arith.select %24, %4, %27 : vector<16x128xi1>, vector<16x128xf32>
      %cst_15 = arith.constant 0.000000e+00 : f32
      %29 = vector.shape_cast %22 : vector<16x1xi1> to vector<16x1xi1>
      %30 = vector.broadcast %29 : vector<16x1xi1> to vector<16x128xi1>
      %31 = vector.broadcast %cst_15 : f32 to vector<16x128xf32>
      %32 = arith.select %30, %28, %31 : vector<16x128xi1>, vector<16x128xf32>
      %cst_16 = arith.constant 0.000000e+00 : f32
      %33 = vector.shape_cast %22 : vector<16x1xi1> to vector<16x1xi1>
      %34 = vector.broadcast %33 : vector<16x1xi1> to vector<16x128xi1>
      %35 = vector.broadcast %cst_16 : f32 to vector<16x128xf32>
      %36 = arith.select %34, %26, %35 : vector<16x128xi1>, vector<16x128xf32>
      %cst_17 = arith.constant 0.000000e+00 : f32
      %37 = vector.shape_cast %22 : vector<16x1xi1> to vector<16x1xi1>
      %38 = vector.broadcast %37 : vector<16x1xi1> to vector<16x128xi1>
      %39 = vector.broadcast %cst_17 : f32 to vector<16x128xf32>
      %40 = arith.select %38, %4, %39 : vector<16x128xi1>, vector<16x128xf32>
      %41 = vector.shape_cast %32 : vector<16x128xf32> to vector<2x8x128xf32>
      %cst_18 = arith.constant dense<0.000000e+00> : vector<8x128xf32>
      %42 = vector.multi_reduction <add>, %41, %cst_18 [0] : vector<2x8x128xf32> to vector<8x128xf32>
      %43 = vector.shape_cast %36 : vector<16x128xf32> to vector<2x8x128xf32>
      %cst_19 = arith.constant dense<0.000000e+00> : vector<8x128xf32>
      %44 = vector.multi_reduction <add>, %43, %cst_19 [0] : vector<2x8x128xf32> to vector<8x128xf32>
      %45 = vector.shape_cast %40 : vector<16x128xf32> to vector<2x8x128xf32>
      %cst_20 = arith.constant dense<0.000000e+00> : vector<8x128xf32>
      %46 = vector.multi_reduction <add>, %45, %cst_20 [0] : vector<2x8x128xf32> to vector<8x128xf32>
      %c0_21 = arith.constant 0 : index
      %c0_22 = arith.constant 0 : index
      %47 = vector.load %arg4[%c0_21, %c0_22] : memref<8x128xf32, #tpu.memory_space<vmem>>, vector<8x128xf32>
      %48 = arith.addf %47, %42 : vector<8x128xf32>
      %c0_23 = arith.constant 0 : index
      %c0_24 = arith.constant 0 : index
      %49 = vector.load %arg4[%c0_23, %c0_24] : memref<8x128xf32, #tpu.memory_space<vmem>>, vector<8x128xf32>
      tpu.vector_store %arg4[%c0_23, %c0_24], %48 {strides = array<i32>} : memref<8x128xf32, #tpu.memory_space<vmem>>, vector<8x128xf32>,
      %c0_25 = arith.constant 0 : index
      %c0_26 = arith.constant 0 : index
      %50 = vector.load %arg5[%c0_25, %c0_26] : memref<8x128xf32, #tpu.memory_space<vmem>>, vector<8x128xf32>
      %51 = arith.addf %50, %44 : vector<8x128xf32>
      %c0_27 = arith.constant 0 : index
      %c0_28 = arith.constant 0 : index
      %52 = vector.load %arg5[%c0_27, %c0_28] : memref<8x128xf32, #tpu.memory_space<vmem>>, vector<8x128xf32>
      tpu.vector_store %arg5[%c0_27, %c0_28], %51 {strides = array<i32>} : memref<8x128xf32, #tpu.memory_space<vmem>>, vector<8x128xf32>,
      %c0_29 = arith.constant 0 : index
      %c0_30 = arith.constant 0 : index
      %53 = vector.load %arg6[%c0_29, %c0_30] : memref<8x128xf32, #tpu.memory_space<vmem>>, vector<8x128xf32>
      %54 = arith.addf %53, %46 : vector<8x128xf32>
      %c0_31 = arith.constant 0 : index
      %c0_32 = arith.constant 0 : index
      %55 = vector.load %arg6[%c0_31, %c0_32] : memref<8x128xf32, #tpu.memory_space<vmem>>, vector<8x128xf32>
      tpu.vector_store %arg6[%c0_31, %c0_32], %54 {strides = array<i32>} : memref<8x128xf32, #tpu.memory_space<vmem>>, vector<8x128xf32>,
    } else {
    }
    %c0_i32_11 = arith.constant 0 : i32
    %15 = arith.cmpi eq, %arg0, %c0_i32_11 : i32
    %16 = arith.extui %15 : i1 to i32
    %c0_i32_12 = arith.constant 0 : i32
    %17 = arith.cmpi ne, %16, %c0_i32_12 : i32
    scf.if %17 {
      %c0_13 = arith.constant 0 : index
      %c0_14 = arith.constant 0 : index
      %18 = vector.load %arg4[%c0_13, %c0_14] : memref<8x128xf32, #tpu.memory_space<vmem>>, vector<8x128xf32>
      %c0_15 = arith.constant 0 : index
      %c0_16 = arith.constant 0 : index
      %c0_17 = arith.constant 0 : index
      %c0_18 = arith.constant 0 : index
      %19 = vector.load %arg3[%c0_15, %c0_16, %c0_17, %c0_18] : memref<1x3x8x128xf32, #tpu.memory_space<vmem>>, vector<1x1x8x128xf32>
      %20 = vector.shape_cast %19 : vector<1x1x8x128xf32> to vector<8x128xf32>
      %21 = vector.shape_cast %18 : vector<8x128xf32> to vector<1x1x8x128xf32>
      tpu.vector_store %arg3[%c0_15, %c0_16, %c0_17, %c0_18], %21 {strides = array<i32>} : memref<1x3x8x128xf32, #tpu.memory_space<vmem>>, vector<1x1x8x128xf32>,
      %c0_19 = arith.constant 0 : index
      %c0_20 = arith.constant 0 : index
      %22 = vector.load %arg5[%c0_19, %c0_20] : memref<8x128xf32, #tpu.memory_space<vmem>>, vector<8x128xf32>
      %c0_21 = arith.constant 0 : index
      %c1 = arith.constant 1 : index
      %c0_22 = arith.constant 0 : index
      %c0_23 = arith.constant 0 : index
      %23 = vector.load %arg3[%c0_21, %c1, %c0_22, %c0_23] : memref<1x3x8x128xf32, #tpu.memory_space<vmem>>, vector<1x1x8x128xf32>
      %24 = vector.shape_cast %23 : vector<1x1x8x128xf32> to vector<8x128xf32>
      %25 = vector.shape_cast %22 : vector<8x128xf32> to vector<1x1x8x128xf32>
      tpu.vector_store %arg3[%c0_21, %c1, %c0_22, %c0_23], %25 {strides = array<i32>} : memref<1x3x8x128xf32, #tpu.memory_space<vmem>>, vector<1x1x8x128xf32>,
      %c0_24 = arith.constant 0 : index
      %c0_25 = arith.constant 0 : index
      %26 = vector.load %arg6[%c0_24, %c0_25] : memref<8x128xf32, #tpu.memory_space<vmem>>, vector<8x128xf32>
      %c0_26 = arith.constant 0 : index
      %c2 = arith.constant 2 : index
      %c0_27 = arith.constant 0 : index
      %c0_28 = arith.constant 0 : index
      %27 = vector.load %arg3[%c0_26, %c2, %c0_27, %c0_28] : memref<1x3x8x128xf32, #tpu.memory_space<vmem>>, vector<1x1x8x128xf32>
      %28 = vector.shape_cast %27 : vector<1x1x8x128xf32> to vector<8x128xf32>
      %29 = vector.shape_cast %26 : vector<8x128xf32> to vector<1x1x8x128xf32>
      tpu.vector_store %arg3[%c0_26, %c2, %c0_27, %c0_28], %29 {strides = array<i32>} : memref<1x3x8x128xf32, #tpu.memory_space<vmem>>, vector<1x1x8x128xf32>,
    } else {
    }
    return
  }
  func.func @transform_0(%arg0: i32) -> (i32, i32) {
    %c0_i32 = arith.constant 0 : i32
    %c0_i32_0 = arith.constant 0 : i32
    return %arg0, %c0_i32 : i32, i32
  }
  func.func @transform_1(%arg0: i32) -> (i32, i32) {
    %c0_i32 = arith.constant 0 : i32
    %c0_i32_0 = arith.constant 0 : i32
    return %arg0, %c0_i32 : i32, i32
  }
  func.func @transform_2(%arg0: i32) -> (i32, i32, i32, i32) {
    %c0_i32 = arith.constant 0 : i32
    %c0_i32_0 = arith.constant 0 : i32
    %c0_i32_1 = arith.constant 0 : i32
    %c0_i32_2 = arith.constant 0 : i32
    %c0_i32_3 = arith.constant 0 : i32
    return %c0_i32, %c0_i32_0, %c0_i32_1, %c0_i32_2 : i32, i32, i32, i32
  }
}

</mosaic_0001>

<llo_original>
// kernel: tpu_custom_call.1
$region0: #{tpu_custom_call.1}
  #allocation0 [shape = 'u32[]', space=smem, size = 0x4, offset = 0x4, fixed_abs, tag = 'smem constant byte address 0x4 - core index']
  #allocation1 [shape = 'u32[72,128]{1,0:T(1,128)}', space=vmem, size = 0x9000, scoped, tag = 'internal scratch']
  #allocation2 [shape = 'f32[8,128]{1,0:T(8,128)}', space=vmem, size = 0x1000, scoped, tag = 'scratch operand']
  #allocation3 [shape = 'f32[8,128]{1,0:T(8,128)}', space=vmem, size = 0x1000, scoped, tag = 'scratch operand']
  #allocation4 [shape = 'f32[8,128]{1,0:T(8,128)}', space=vmem, size = 0x1000, scoped, tag = 'scratch operand']
  %s0 = inlined_call_operand.hbm [shape: f32[16,128], index: 0, kind: input, shape index: {}]
  %s1 = inlined_call_operand.hbm [shape: f32[16,128], index: 1, kind: input, shape index: {}]
  %s2 = inlined_call_operand.hbm [shape: f32[1,3,8,128], index: 2, kind: output, shape index: {}]
  %s3 = sld [smem:[#allocation0]]
  $region42: #{tpu_custom_call.1} parent=0
    _
  %s5 = ssub.s32 1, %s3
  %s6 = scalar_select 0, %s5, %s3
  $region1: #{tpu_custom_call.1} parent=0
    #allocation5 [shape = 'u8[8192]{0}', space=vmem, size = 0x2000, scoped, tag = 'input window, operand 0, single buffered']
    #allocation6 [shape = 's32[1]{0}', space=sflag, size = 0x4, scoped, tag = 'scoped memory for tpu_custom_call.1']
    #allocation7 [shape = 's32[1]{0}', space=sflag, size = 0x4, scoped, tag = 'scoped memory for tpu_custom_call.1']
    #allocation8 [shape = 'u8[8192]{0}', space=vmem, size = 0x2000, scoped, tag = 'input window, operand 1, single buffered']
    #allocation9 [shape = 's32[1]{0}', space=sflag, size = 0x4, scoped, tag = 'scoped memory for tpu_custom_call.1']
    #allocation10 [shape = 'u8[12288]{0}', space=vmem, size = 0x3000, scoped, tag = 'output window, operand 0, single buffered']
    %7 = vsyncpa [#allocation6], 0
    %8 = vsyncpa [#allocation9], 0
    %9 = vsyncpa [#allocation7], 0
    // Predicated region
    $region2: #{tpu_custom_call.1} parent=1 // pred_check
      _
    $region3: #{tpu_custom_call.1} parent=1 // pred_check_branch
      %11 = sbr.rel (0) target = $region5
    $region4: #{tpu_custom_call.1} parent=1 // pred_region
      %13 = vsyncadd [#allocation6], 0
      %s14 = sshll.u32 %s0, 4
      %s15 = int_to_ptr.hbm [resolvable:$true] %s14
      %s16 = sshll.u32 [#allocation5], 4
      %s17 = int_to_ptr.vmem [resolvable:$true] %s16
      %22 = dma.hbm_to_vmem [thread:$0]  %s15, 256, %s17, [#allocation6], 128, 128, 8
    $region5: #{tpu_custom_call.1} parent=1 // pred_fallthru
      _
    // Predicated region
    $region6: #{tpu_custom_call.1} parent=1 // pred_check
      _
    $region7: #{tpu_custom_call.1} parent=1 // pred_check_branch
      %24 = sbr.rel (0) target = $region9
    $region8: #{tpu_custom_call.1} parent=1 // pred_region
      %26 = vsyncadd [#allocation9], 0
      %s27 = sshll.u32 %s1, 4
      %s28 = int_to_ptr.hbm [resolvable:$true] %s27
      %s29 = sshll.u32 [#allocation8], 4
      %s30 = int_to_ptr.vmem [resolvable:$true] %s29
      %35 = dma.hbm_to_vmem [thread:$0]  %s28, 256, %s30, [#allocation9], 128, 128, 8
    $region9: #{tpu_custom_call.1} parent=1 // pred_fallthru
      _
    // Predicated region
    $region10: #{tpu_custom_call.1} parent=1 // pred_check
      _
    $region11: #{tpu_custom_call.1} parent=1 // pred_check_branch
      %37 = sbr.rel (0) target = $region13
    $region12: #{tpu_custom_call.1} parent=1 // pred_region
      %39 = dma.done [#allocation6], 256
    $region13: #{tpu_custom_call.1} parent=1 // pred_fallthru
      _
    // Predicated region
    $region14: #{tpu_custom_call.1} parent=1 // pred_check
      _
    $region15: #{tpu_custom_call.1} parent=1 // pred_check_branch
      %41 = sbr.rel (0) target = $region17
    $region16: #{tpu_custom_call.1} parent=1 // pred_region
      %43 = dma.done [#allocation9], 256
    $region17: #{tpu_custom_call.1} parent=1 // pred_fallthru
      _
    %p44 = scmp.eq.s32.totalorder 0, 0
    // Predicated region
    $region18: #{tpu_custom_call.1} parent=1 // pred_check
      %p45 = pneg %p44
    $region19: #{tpu_custom_call.1} parent=1 // pred_check_branch
      %47 = sbr.rel (%p45) target = $region21
    $region20: #{tpu_custom_call.1} parent=1 // pred_region
      %48 = vst [vmem:[#allocation2] sm:$0xff] 0.0
      %49 = vst [vmem:[#allocation3] sm:$0xff] 0.0
      %50 = vst [vmem:[#allocation4] sm:$0xff] 0.0
    $region21: #{tpu_custom_call.1} parent=1 // pred_fallthru
      _
    %v51 = vld [vmem:[#allocation5] sm:$0xff]
    %v52 = vld [vmem:[#allocation5 + $0x8] sm:$0xff]
    %v53 = vld [vmem:[#allocation8] sm:$0xff]
    %v54 = vld [vmem:[#allocation8 + $0x8] sm:$0xff]
    %s55 = smul.u32 0, 16
    %s56 = sadd.s32 %s55, 16
    %p57 = scmp.le.s32.totalorder %s56, 16
    // Predicated region
    $region22: #{tpu_custom_call.1} parent=1 // pred_check
      %p58 = pneg %p57
    $region23: #{tpu_custom_call.1} parent=1 // pred_check_branch
      %60 = sbr.rel (%p58) target = $region25
    $region24: #{tpu_custom_call.1} parent=1 // pred_region
      %vm61 = vcmp.gt.f32.partialorder %v51, 0.5
      %vm62 = vcmp.gt.f32.partialorder %v52, 0.5
      %v63 = vsel %vm61, 1, 0
      %v64 = vsel %vm62, 1, 0
      %v65 = vcvt.s32.f32 %v63
      %v66 = vcvt.s32.f32 %v64
      %v67 = vsel %vm61, %v53, 0.0
      %v68 = vsel %vm62, %v54, 0.0
      %v69 = vadd.f32 %v67, %v68
      %v70 = vadd.f32 %v65, %v66
      %v71 = vadd.f32 %v53, %v54
      %v72 = vld [vmem:[#allocation2] sm:$0xff]
      %v73 = vadd.f32 %v72, %v69
      %74 = vst [vmem:[#allocation2] sm:$0xff] %v73
      %v75 = vld [vmem:[#allocation3] sm:$0xff]
      %v76 = vadd.f32 %v75, %v70
      %77 = vst [vmem:[#allocation3] sm:$0xff] %v76
      %v78 = vld [vmem:[#allocation4] sm:$0xff]
      %v79 = vadd.f32 %v78, %v71
      %80 = vst [vmem:[#allocation4] sm:$0xff] %v79
    $region25: #{tpu_custom_call.1} parent=1 // pred_fallthru
      _
    %p81 = scmp.gt.s32.totalorder %s56, 16
    // Predicated region
    $region26: #{tpu_custom_call.1} parent=1 // pred_check
      %p82 = pneg %p81
    $region27: #{tpu_custom_call.1} parent=1 // pred_check_branch
      %84 = sbr.rel (%p82) target = $region29
    $region28: #{tpu_custom_call.1} parent=1 // pred_region
      %v85 = vlaneseq
      %v86 = vshrl.u32 %v85, 7
      %v87 = vadd.s32 %v86, 8
      %v88 = vstv %s55
      %v89 = vadd.s32 %v88, %v86
      %v90 = vadd.s32 %v88, %v87
      %vm91 = vcmp.lt.s32.totalorder %v89, 16
      %vm92 = vcmp.lt.s32.totalorder %v90, 16
      %vm93 = vcmp.gt.f32.partialorder %v51, 0.5
      %vm94 = vcmp.gt.f32.partialorder %v52, 0.5
      %v95 = vsel %vm93, 1, 0
      %v96 = vsel %vm94, 1, 0
      %v97 = vcvt.s32.f32 %v95
      %v98 = vcvt.s32.f32 %v96
      %v99 = vsel %vm93, %v53, 0.0
      %v100 = vsel %vm94, %v54, 0.0
      %v101 = vsel %vm91, 1, 0
      %v102 = vsel %vm92, 1, 0
      %vm103 = vcmp.eq.s32.totalorder %v101, 1
      %vm104 = vcmp.eq.s32.totalorder %v102, 1
      %v105 = vsel %vm103, %v99, 0.0
      %v106 = vsel %vm104, %v100, 0.0
      %v107 = vsel %vm103, %v97, 0.0
      %v108 = vsel %vm104, %v98, 0.0
      %v109 = vsel %vm103, %v53, 0.0
      %v110 = vsel %vm104, %v54, 0.0
      %v111 = vadd.f32 %v105, %v106
      %v112 = vadd.f32 %v107, %v108
      %v113 = vadd.f32 %v109, %v110
      %v114 = vld [vmem:[#allocation2] sm:$0xff]
      %v115 = vadd.f32 %v114, %v111
      %116 = vst [vmem:[#allocation2] sm:$0xff] %v115
      %v117 = vld [vmem:[#allocation3] sm:$0xff]
      %v118 = vadd.f32 %v117, %v112
      %119 = vst [vmem:[#allocation3] sm:$0xff] %v118
      %v120 = vld [vmem:[#allocation4] sm:$0xff]
      %v121 = vadd.f32 %v120, %v113
      %122 = vst [vmem:[#allocation4] sm:$0xff] %v121
    $region29: #{tpu_custom_call.1} parent=1 // pred_fallthru
      _
    // Predicated region
    $region30: #{tpu_custom_call.1} parent=1 // pred_check
      %p123 = pneg %p44
    $region31: #{tpu_custom_call.1} parent=1 // pred_check_branch
      %125 = sbr.rel (%p123) target = $region33
    $region32: #{tpu_custom_call.1} parent=1 // pred_region
      %v126 = vld [vmem:[#allocation2] sm:$0xff]
      %127 = vst [vmem:[#allocation10] sm:$0xff] %v126
      %v128 = vld [vmem:[#allocation3] sm:$0xff]
      %s129 = scalar_lea.vmem [#allocation10], 8
      %130 = vst [vmem:[%s129] sm:$0xff] %v128
      %v131 = vld [vmem:[#allocation4] sm:$0xff]
      %s132 = scalar_lea.vmem [#allocation10], 16
      %133 = vst [vmem:[%s132] sm:$0xff] %v131
    $region33: #{tpu_custom_call.1} parent=1 // pred_fallthru
      _
    // Predicated region
    $region34: #{tpu_custom_call.1} parent=1 // pred_check
      _
    $region35: #{tpu_custom_call.1} parent=1 // pred_check_branch
      %135 = sbr.rel (0) target = $region37
    $region36: #{tpu_custom_call.1} parent=1 // pred_region
      %137 = vsyncadd [#allocation7], 0
      %s138 = sshll.u32 [#allocation10], 4
      %s139 = int_to_ptr.vmem [resolvable:$true] %s138
      %s140 = sshll.u32 %s2, 4
      %s141 = int_to_ptr.hbm [resolvable:$true] %s140
      %146 = dma.vmem_to_hbm [thread:$0]  %s139, 384, %s141, [#allocation7], 128, 128, 8
    $region37: #{tpu_custom_call.1} parent=1 // pred_fallthru
      _
    // Predicated region
    $region38: #{tpu_custom_call.1} parent=1 // pred_check
      _
    $region39: #{tpu_custom_call.1} parent=1 // pred_check_branch
      %148 = sbr.rel (0) target = $region41
    $region40: #{tpu_custom_call.1} parent=1 // pred_region
      %150 = dma.done [#allocation7], 384
    $region41: #{tpu_custom_call.1} parent=1 // pred_fallthru
      _
    %151 = vsyncpa [#allocation6], 1
    %152 = vsyncpa [#allocation9], 1
    %153 = vsyncpa [#allocation7], 1

</llo_original>
